<compile_context>
chip_gen: v5e
topology: v5e:2x2
jax: 0.10.0
libtpu: 0.0.40
codegen_flags: <defaults>
</compile_context>

<pallas_src>
from functools import partial

import jax
import jax.numpy as jnp
from jax import lax
from jax.experimental import pallas as pl
from jax.experimental.pallas import tpu as pltpu

_EPS = 1e-12  # F.normalize default eps


def _prototype_kernel(label_ref, proto_ref, feat_ref, out_ref):
    """label_ref: SMEM (1,) i32 (scalar prefetch); proto/out: (TR, D) tile; feat: (2, D)."""
    tr = out_ref.shape[0]
    start = 3 * label_ref[0]                       # first row to overwrite
    tile_row0 = pl.program_id(0) * tr              # global row index of this tile's row 0

    p = proto_ref[...]                             # (TR, D)
    out_ref[...] = p                               # default: pass rows through

    # Only the tile(s) overlapping rows [start, start+2) do the 2-row scatter.
    hit = jnp.logical_and(start < tile_row0 + tr, start + 2 > tile_row0)

    @pl.when(hit)
    def _():
        row_ids = tile_row0 + lax.broadcasted_iota(jnp.int32, (tr, 1), 0)  # (TR, 1)
        f0 = feat_ref[0:1, :]                      # (1, D)
        f1 = feat_ref[1:2, :]                      # (1, D)
        out_ref[...] = jnp.where(row_ids == start, f0,
                                 jnp.where(row_ids == start + 1, f1, p))

    # Row-wise L2 normalization of the post-update rows.
    upd = out_ref[...]                                      # sees the scatter above
    sq = jnp.sum(upd * upd, axis=1, keepdims=True)          # (TR, 1)
    denom = jnp.maximum(jnp.sqrt(sq), _EPS)                 # matches F.normalize clamp
    out_ref[...] = upd * pl.reciprocal(denom, approx=False)  # EUP recip + VPU mul


def _tile_rows(num_rows: int) -> int:
    # Single block when small (block dim == full dim satisfies the (8,128) rule);
    # otherwise 1024-row tiles (multiple of 8): ~0.5 MiB per block at D=128,
    # comfortably inside v7x's 32 MiB scoped-VMEM default even double-buffered.
    if num_rows <= 1024:
        return num_rows
    return 1024


@partial(jax.jit, donate_argnums=(0,))
def prototype_forward(prototypes, feat, label):
    """prototypes: (3*num_class, low_dim) f32; feat: (2, low_dim) f32; label: int scalar."""
    P, D = prototypes.shape
    tr = _tile_rows(P)
    label_arr = jnp.asarray(label, dtype=jnp.int32).reshape((1,))

    grid_spec = pltpu.PrefetchScalarGridSpec(
        num_scalar_prefetch=1,                              # label -> SMEM
        grid=(pl.cdiv(P, tr),),
        in_specs=[
            pl.BlockSpec((tr, D), lambda i, lbl: (i, 0)),   # prototypes row tile
            pl.BlockSpec((2, D), lambda i, lbl: (0, 0)),    # feat (whole, tiny)
        ],
        out_specs=pl.BlockSpec((tr, D), lambda i, lbl: (i, 0)),
    )

    return pl.pallas_call(
        _prototype_kernel,
        out_shape=jax.ShapeDtypeStruct((P, D), prototypes.dtype),
        grid_spec=grid_spec,
        # Call args are (label_arr, prototypes, feat): alias prototypes -> output 0
        # (in-place buffer update, mirrors the PyTorch registered buffer).
        input_output_aliases={1: 0},
        compiler_params=pltpu.CompilerParams(
            dimension_semantics=("parallel",)),
    )(label_arr, prototypes, feat)


def _reference(prototypes, feat, label):
    """Pure-JAX reference mirroring the PyTorch forward exactly."""
    upd = lax.dynamic_update_slice(prototypes, feat, (3 * label, 0))
    denom = jnp.maximum(jnp.linalg.norm(upd, axis=1, keepdims=True), _EPS)
    return upd / denom


if __name__ == "__main__":
    # args.num_class = 4, args.low_dim = 32  ->  prototypes: (12, 32)
    # (production PiCO uses low_dim=128, which is already lane-dense on TPU;
    #  padding D here would add extra HBM copies and defeat the in-place aliasing)
    num_class, low_dim = 4, 32
    key = jax.random.PRNGKey(0)
    k1, k2 = jax.random.split(key)

    prototypes = jax.random.normal(k1, (3 * num_class, low_dim), dtype=jnp.float32)
    feat = jax.random.normal(k2, (2, low_dim), dtype=jnp.float32)
    label = 2
    assert 0 <= 3 * label + 1 < 3 * num_class, "label out of range for prototype table"

    # Compute the reference first: prototypes is donated (consumed) by the kernel call.
    ref = jax.block_until_ready(_reference(prototypes, feat, label))

    out = prototype_forward(prototypes, feat, label)
    out = jax.block_until_ready(out)

    assert out.shape == (3 * num_class, low_dim)
    assert jnp.allclose(out, ref, atol=1e-5, rtol=1e-5), "mismatch vs reference"

    print("KERNEL_OK")
</pallas_src>

<mosaic_0001>
module attributes {stable_mosaic.version = 11 : i64} {
  func.func @_prototype_kernel(%arg0: i32, %arg1: memref<1xi32, #tpu.memory_space<smem>>, %arg2: memref<12x32xf32, #tpu.memory_space<vmem>>, %arg3: memref<2x32xf32, #tpu.memory_space<vmem>>, %arg4: memref<12x32xf32, #tpu.memory_space<vmem>>) attributes {dimension_semantics = [#tpu.dimension_semantics<parallel>], iteration_bounds = array<i64: 1>, scalar_prefetch = 1 : i64, scratch_operands = 0 : i64, tpu.core_type = #tpu.core_type<tc>, window_params = [{transform_indices = @transform_0, window_bounds = array<i64: 12, 32>}, {pipeline_mode = #tpu.pipeline_mode<synchronous>, transform_indices = @transform_1, window_bounds = array<i64: 2, 32>}, {transform_indices = @transform_2, window_bounds = array<i64: 12, 32>}]} {
    %c0 = arith.constant 0 : index
    %0 = memref.load %arg1[%c0] : memref<1xi32, #tpu.memory_space<smem>>
    %c3_i32 = arith.constant 3 : i32
    %1 = arith.muli %c3_i32, %0 : i32
    %c12_i32 = arith.constant 12 : i32
    %2 = arith.muli %arg0, %c12_i32 : i32
    %c0_0 = arith.constant 0 : index
    %c0_1 = arith.constant 0 : index
    %3 = vector.load %arg2[%c0_0, %c0_1] : memref<12x32xf32, #tpu.memory_space<vmem>>, vector<12x32xf32>
    %c0_2 = arith.constant 0 : index
    %c0_3 = arith.constant 0 : index
    %4 = vector.load %arg4[%c0_2, %c0_3] : memref<12x32xf32, #tpu.memory_space<vmem>>, vector<12x32xf32>
    tpu.vector_store %arg4[%c0_2, %c0_3], %3 {strides = array<i32>} : memref<12x32xf32, #tpu.memory_space<vmem>>, vector<12x32xf32>,
    %c12_i32_4 = arith.constant 12 : i32
    %5 = arith.addi %2, %c12_i32_4 : i32
    %6 = arith.cmpi slt, %1, %5 : i32
    %c2_i32 = arith.constant 2 : i32
    %7 = arith.addi %1, %c2_i32 : i32
    %8 = arith.cmpi sgt, %7, %2 : i32
    %9 = arith.andi %6, %8 : i1
    %10 = arith.extui %9 : i1 to i32
    %c0_i32 = arith.constant 0 : i32
    %11 = arith.cmpi ne, %10, %c0_i32 : i32
    scf.if %11 {
      %23 = tpu.iota {dimensions = array<i32: 0>} : vector<12x1xi32>
      %24 = vector.broadcast %2 : i32 to vector<12x1xi32>
      %25 = arith.addi %24, %23 : vector<12x1xi32>
      %c0_10 = arith.constant 0 : index
      %c0_11 = arith.constant 0 : index
      %26 = vector.load %arg3[%c0_10, %c0_11] : memref<2x32xf32, #tpu.memory_space<vmem>>, vector<1x32xf32>
      %c1 = arith.constant 1 : index
      %c0_12 = arith.constant 0 : index
      %27 = vector.load %arg3[%c1, %c0_12] : memref<2x32xf32, #tpu.memory_space<vmem>>, vector<1x32xf32>
      %28 = vector.broadcast %1 : i32 to vector<12x1xi32>
      %29 = arith.cmpi eq, %25, %28 : vector<12x1xi32>
      %c1_i32 = arith.constant 1 : i32
      %30 = arith.addi %1, %c1_i32 : i32
      %31 = vector.broadcast %30 : i32 to vector<12x1xi32>
      %32 = arith.cmpi eq, %25, %31 : vector<12x1xi32>
      %33 = vector.shape_cast %32 : vector<12x1xi1> to vector<12x1xi1>
      %34 = vector.broadcast %33 : vector<12x1xi1> to vector<12x32xi1>
      %35 = vector.shape_cast %27 : vector<1x32xf32> to vector<1x32xf32>
      %36 = vector.broadcast %35 : vector<1x32xf32> to vector<12x32xf32>
      %37 = arith.select %34, %36, %3 : vector<12x32xi1>, vector<12x32xf32>
      %38 = vector.shape_cast %29 : vector<12x1xi1> to vector<12x1xi1>
      %39 = vector.broadcast %38 : vector<12x1xi1> to vector<12x32xi1>
      %40 = vector.shape_cast %26 : vector<1x32xf32> to vector<1x32xf32>
      %41 = vector.broadcast %40 : vector<1x32xf32> to vector<12x32xf32>
      %42 = arith.select %39, %41, %37 : vector<12x32xi1>, vector<12x32xf32>
      %c0_13 = arith.constant 0 : index
      %c0_14 = arith.constant 0 : index
      %43 = vector.load %arg4[%c0_13, %c0_14] : memref<12x32xf32, #tpu.memory_space<vmem>>, vector<12x32xf32>
      tpu.vector_store %arg4[%c0_13, %c0_14], %42 {strides = array<i32>} : memref<12x32xf32, #tpu.memory_space<vmem>>, vector<12x32xf32>,
    } else {
    }
    %c0_5 = arith.constant 0 : index
    %c0_6 = arith.constant 0 : index
    %12 = vector.load %arg4[%c0_5, %c0_6] : memref<12x32xf32, #tpu.memory_space<vmem>>, vector<12x32xf32>
    %13 = arith.mulf %12, %12 : vector<12x32xf32>
    %cst = arith.constant dense<0.000000e+00> : vector<12xf32>
    %14 = vector.multi_reduction <add>, %13, %cst [1] : vector<12x32xf32> to vector<12xf32>
    %15 = vector.shape_cast %14 : vector<12xf32> to vector<12x1xf32>
    %16 = math.sqrt %15 : vector<12x1xf32>
    %cst_7 = arith.constant 9.99999996E-13 : f32
    %17 = vector.broadcast %cst_7 : f32 to vector<12x1xf32>
    %18 = arith.maximumf %16, %17 : vector<12x1xf32>
    %19 = tpu.reciprocal %18 : vector<12x1xf32> -> vector<12x1xf32>
    %20 = vector.broadcast %19 : vector<12x1xf32> to vector<12x32xf32>
    %21 = arith.mulf %12, %20 : vector<12x32xf32>
    %c0_8 = arith.constant 0 : index
    %c0_9 = arith.constant 0 : index
    %22 = vector.load %arg4[%c0_8, %c0_9] : memref<12x32xf32, #tpu.memory_space<vmem>>, vector<12x32xf32>
    tpu.vector_store %arg4[%c0_8, %c0_9], %21 {strides = array<i32>} : memref<12x32xf32, #tpu.memory_space<vmem>>, vector<12x32xf32>,
    return
  }
  func.func @transform_0(%arg0: i32, %arg1: memref<1xi32, #tpu.memory_space<smem>>) -> (i32, i32) {
    %c0_i32 = arith.constant 0 : i32
    %c0_i32_0 = arith.constant 0 : i32
    return %arg0, %c0_i32 : i32, i32
  }
  func.func @transform_1(%arg0: i32, %arg1: memref<1xi32, #tpu.memory_space<smem>>) -> (i32, i32) {
    %c0_i32 = arith.constant 0 : i32
    %c0_i32_0 = arith.constant 0 : i32
    %c0_i32_1 = arith.constant 0 : i32
    return %c0_i32, %c0_i32_0 : i32, i32
  }
  func.func @transform_2(%arg0: i32, %arg1: memref<1xi32, #tpu.memory_space<smem>>) -> (i32, i32) {
    %c0_i32 = arith.constant 0 : i32
    %c0_i32_0 = arith.constant 0 : i32
    return %arg0, %c0_i32 : i32, i32
  }
}

</mosaic_0001>

<llo_original>
// kernel: prototype_forward.1
$region0: #{prototype_forward.1}
  #allocation0 [shape = 'u32[]', space=smem, size = 0x4, offset = 0x4, fixed_abs, tag = 'smem constant byte address 0x4 - core index']
  #allocation1 [shape = 'u32[72,128]{1,0:T(1,128)}', space=vmem, size = 0x9000, scoped, tag = 'internal scratch']
  #allocation2 [shape = 's32[1]{0}', space=sflag, size = 0x4, scoped, tag = 'scoped memory for prototype_forward.1']
  #allocation3 [shape = 's32[1]{0:T(128)S(6)}', space=smem, size = 0x200, scoped, tag = 'prefetched SMEM operand 0']
  %s0 = inlined_call_operand.<no memory space> [shape: s32[1], index: 0, kind: input, shape index: {}]
  %s1 = inlined_call_operand.hbm [shape: f32[12,32], index: 1, kind: input, shape index: {}, may-alias: {1,3}]
  %s2 = inlined_call_operand.vmem [shape: f32[2,32], index: 2, kind: input, shape index: {}]
  %s3 = inlined_call_operand.hbm [shape: f32[12,32], index: 3, kind: output, shape index: {}, may-alias: {1,3}]
  %s4 = sld [smem:[#allocation0]]
  $region26: #{prototype_forward.1} parent=0
    _
  %s6 = ssub.s32 1, %s4
  %s7 = scalar_select 0, %s6, %s4
  %8 = sst [smem:[#allocation3]] %s0
  $region1: #{prototype_forward.1} parent=0
    #allocation4 [shape = 'u8[8192]{0}', space=vmem, size = 0x2000, scoped, tag = 'input window, operand 1, single buffered']
    #allocation5 [shape = 's32[1]{0}', space=sflag, size = 0x4, scoped, tag = 'scoped memory for prototype_forward.1']
    #allocation6 [shape = 's32[1]{0}', space=sflag, size = 0x4, scoped, tag = 'scoped memory for prototype_forward.1']
    #allocation7 [shape = 'u8[8192]{0}', space=vmem, size = 0x2000, scoped, tag = 'output window, operand 0, single buffered']
    %9 = vsyncpa [#allocation5], 0
    %10 = vsyncpa [#allocation6], 0
    // Predicated region
    $region2: #{prototype_forward.1} parent=1 // pred_check
      _
    $region3: #{prototype_forward.1} parent=1 // pred_check_branch
      %12 = sbr.rel (0) target = $region5
    $region4: #{prototype_forward.1} parent=1 // pred_region
      %14 = vsyncadd [#allocation5], 0
      %s15 = sshll.u32 %s1, 4
      %s16 = int_to_ptr.hbm [resolvable:$true] %s15
      %s17 = sshll.u32 [#allocation4], 4
      %s18 = int_to_ptr.vmem [resolvable:$true] %s17
      %23 = dma.hbm_to_vmem [thread:$0]  %s16, 256, %s18, [#allocation5], 128, 128, 8
    $region5: #{prototype_forward.1} parent=1 // pred_fallthru
      _
    // Predicated region
    $region6: #{prototype_forward.1} parent=1 // pred_check
      _
    $region7: #{prototype_forward.1} parent=1 // pred_check_branch
      %25 = sbr.rel (0) target = $region9
    $region8: #{prototype_forward.1} parent=1 // pred_region
      _
    $region9: #{prototype_forward.1} parent=1 // pred_fallthru
      _
    // Predicated region
    $region10: #{prototype_forward.1} parent=1 // pred_check
      _
    $region11: #{prototype_forward.1} parent=1 // pred_check_branch
      %27 = sbr.rel (0) target = $region13
    $region12: #{prototype_forward.1} parent=1 // pred_region
      %29 = dma.done [#allocation5], 256
    $region13: #{prototype_forward.1} parent=1 // pred_fallthru
      _
    %s30 = sld [smem:[#allocation3]]
    %s31 = smul.u32 %s30, 3
    %s32 = smul.u32 0, 12
    %v33 = vld [vmem:[#allocation4] sm:$0xff]
    %v34 = vld [vmem:[#allocation4 + $0x8] sm:$0xf]
    %vm35 = vcmask 261120
    %36 = vst.msk [vmem:[#allocation7] sm:$0xff] %vm35, %v33
    %vm37 = vcmask 257024
    %38 = vst.msk [vmem:[#allocation7 + $0x8] sm:$0xf] %vm37, %v34
    %s39 = sadd.s32 %s32, 12
    %p40 = scmp.lt.s32.totalorder %s31, %s39
    %s41 = sadd.s32 %s31, 2
    %p42 = scmp.gt.s32.totalorder %s41, %s32
    %p43 = pnand %p40, %p42
    %p44 = pneg %p43
    // Predicated region
    $region14: #{prototype_forward.1} parent=1 // pred_check
      _
    $region15: #{prototype_forward.1} parent=1 // pred_check_branch
      %46 = sbr.rel (%p43) target = $region17
    $region16: #{prototype_forward.1} parent=1 // pred_region
      %v47 = vlaneseq
      %v48 = vshrl.u32 %v47, 7
      %v49 = vadd.s32 %v48, 8
      %v50 = vstv %s32
      %v51 = vadd.s32 %v50, %v48
      %v52 = vadd.s32 %v50, %v49
      %v53 = vld [vmem:[%s2] sm:$0x1]
      %v54 = vld [vmem:[%s2 + $0x1] sm:$0x1]
      %v55 = vstv %s31
      %vm56 = vcmp.eq.s32.totalorder %v51, %v55
      %vm57 = vcmp.eq.s32.totalorder %v52, %v55
      %s58 = sadd.s32 %s31, 1
      %v59 = vstv %s58
      %vm60 = vcmp.eq.s32.totalorder %v51, %v59
      %vm61 = vcmp.eq.s32.totalorder %v52, %v59
      %v62 = vsel %vm60, 1, 0
      %v63 = vsel %vm61, 1, 0
      %vm64 = vcmp.eq.s32.totalorder %v62, 1
      %vm65 = vcmp.eq.s32.totalorder %v63, 1
      %v66 = vperm.slane %v54, 0
      %v67 = vsel %vm64, %v66, %v33
      %v68 = vsel %vm65, %v66, %v34
      %v69 = vsel %vm56, 1, 0
      %v70 = vsel %vm57, 1, 0
      %vm71 = vcmp.eq.s32.totalorder %v69, 1
      %vm72 = vcmp.eq.s32.totalorder %v70, 1
      %v73 = vperm.slane %v53, 0
      %v74 = vsel %vm71, %v73, %v67
      %v75 = vsel %vm72, %v73, %v68
      %76 = vst.msk [vmem:[#allocation7] sm:$0xff] %vm35, %v74
      %77 = vst.msk [vmem:[#allocation7 + $0x8] sm:$0xf] %vm37, %v75
    $region17: #{prototype_forward.1} parent=1 // pred_fallthru
      _
    %v78 = vld [vmem:[#allocation7] sm:$0xff]
    %v79 = vld [vmem:[#allocation7 + $0x8] sm:$0xf]
    %v80 = vmul.f32 %v78, %v78
    %v81 = vmul.f32 %v79, %v79
    %v82 = vsel %vm35, %v80, 0.0
    %83 = vadd.xlane.f32.xlu0 %v82
    %v84 = vpop.xlane.xlu0 %83
    %v85 = vsel %vm37, %v81, 0.0
    %86 = vadd.xlane.f32.xlu0 %v85
    %v87 = vpop.xlane.xlu0 %86
    %v88 = vrsqrt.pop %v84
    %v89 = vmul.f32 %v88, %v84
    %v90 = vmul.f32 %v89, %v88
    %v91 = vmul.f32 0.5, %v90
    %v92 = vsub.f32 1.5, %v91
    %v93 = vmul.f32 %v88, %v92
    %v94 = vmul.f32 %v84, %v93
    %vm95 = vcmp.eq.f32.partialorder %v84, inf
    %v96 = vsel %vm95, %v84, %v94
    %vm97 = vcmp.eq.f32.partialorder %v84, 0.0
    %v98 = vand.u32 %v84, 2147483648
    %v99 = vsel %vm97, %v98, %v96
    %v100 = vrsqrt.pop %v87
    %v101 = vmul.f32 %v100, %v87
    %v102 = vmul.f32 %v101, %v100
    %v103 = vmul.f32 0.5, %v102
    %v104 = vsub.f32 1.5, %v103
    %v105 = vmul.f32 %v100, %v104
    %v106 = vmul.f32 %v87, %v105
    %vm107 = vcmp.eq.f32.partialorder %v87, inf
    %v108 = vsel %vm107, %v87, %v106
    %vm109 = vcmp.eq.f32.partialorder %v87, 0.0
    %v110 = vand.u32 %v87, 2147483648
    %v111 = vsel %vm109, %v110, %v108
    %v112 = vmax.f32 %v99, 1e-12
    %v113 = vmax.f32 %v111, 1e-12
    %v114 = vrcp.pop %v112
    %v115 = vmul.f32 %v112, %v114
    %v116 = vsub.f32 1.0, %v115
    %v117 = vmul.f32 %v114, %v116
    %v118 = vadd.f32 %v114, %v117
    %vm119 = vweird.f32 %v112
    %vm120 = vweird.f32 %v114
    %vm121 = vmor %vm119, %vm120
    %v122 = vsel %vm121, %v114, %v118
    %v123 = vand.u32 2147483647, %v112
    %vm124 = vcmp.eq.f32.partialorder %v123, 8.507059e+37
    %v125 = vand.u32 %v112, 2147483648
    %v126 = vor.u32 1.1754944e-38, %v125
    %v127 = vsel %vm124, %v126, %v122
    %v128 = vrcp.pop %v113
    %v129 = vmul.f32 %v113, %v128
    %v130 = vsub.f32 1.0, %v129
    %v131 = vmul.f32 %v128, %v130
    %v132 = vadd.f32 %v128, %v131
    %vm133 = vweird.f32 %v113
    %vm134 = vweird.f32 %v128
    %vm135 = vmor %vm133, %vm134
    %v136 = vsel %vm135, %v128, %v132
    %v137 = vand.u32 2147483647, %v113
    %vm138 = vcmp.eq.f32.partialorder %v137, 8.507059e+37
    %v139 = vand.u32 %v113, 2147483648
    %v140 = vor.u32 1.1754944e-38, %v139
    %v141 = vsel %vm138, %v140, %v136
    %v142 = vmul.f32 %v78, %v127
    %v143 = vmul.f32 %v79, %v141
    %144 = vst.msk [vmem:[#allocation7] sm:$0xff] %vm35, %v142
    %145 = vst.msk [vmem:[#allocation7 + $0x8] sm:$0xf] %vm37, %v143
    // Predicated region
    $region18: #{prototype_forward.1} parent=1 // pred_check
      _
    $region19: #{prototype_forward.1} parent=1 // pred_check_branch
      %147 = sbr.rel (0) target = $region21
    $region20: #{prototype_forward.1} parent=1 // pred_region
      %149 = vsyncadd [#allocation6], 0
      %s150 = sshll.u32 [#allocation7], 4
      %s151 = int_to_ptr.vmem [resolvable:$true] %s150
      %s152 = sshll.u32 %s3, 4
      %s153 = int_to_ptr.hbm [resolvable:$true] %s152
      %158 = dma.vmem_to_hbm [thread:$0]  %s151, 256, %s153, [#allocation6], 128, 128, 8
    $region21: #{prototype_forward.1} parent=1 // pred_fallthru
      _
    // Predicated region
    $region22: #{prototype_forward.1} parent=1 // pred_check
      _
    $region23: #{prototype_forward.1} parent=1 // pred_check_branch
      %160 = sbr.rel (0) target = $region25
    $region24: #{prototype_forward.1} parent=1 // pred_region
      %162 = dma.done [#allocation6], 256
    $region25: #{prototype_forward.1} parent=1 // pred_fallthru
      _
    %163 = vsyncpa [#allocation5], 1
    %164 = vsyncpa [#allocation6], 1

</llo_original>
